<compile_context>
chip_gen: v5e
topology: v5e:2x2
jax: 0.10.0
libtpu: 0.0.40
codegen_flags: <defaults>
</compile_context>

<pallas_src>
import jax
import jax.numpy as jnp
from jax.experimental import pallas as pl
from jax.experimental.pallas import tpu as pltpu


def _round_up(x, m):
    return (x + m - 1) // m * m


def policy_head_kernel(cw_ref, cb_ref, x_ref, wfc_ref, fcb_ref, o_ref):
    # cw_ref : (2, C)      f32 SMEM  BN-folded 1x1 conv weight
    # cb_ref : (2,)        f32 SMEM  BN-folded conv bias
    # x_ref  : (TB, C, HW) f32 VMEM  input tile (batch, channels, flat spatial)
    # wfc_ref: (2, HW, HW) bf16 VMEM FC weight, split per conv channel, pre-transposed
    # fcb_ref: (1, HW)     f32 VMEM  FC bias
    # o_ref  : (TB, HW)    f32 VMEM  log-probabilities
    _, C, _ = x_ref.shape

    # 1x1 conv (+ folded BN) as 2*C scalar-broadcast FMAs over lane-dense
    # (TB, HW) slabs — pure VPU work, hides under the MXU matmuls below.
    xc = x_ref[:, 0, :]
    acc0 = xc * cw_ref[0, 0]
    acc1 = xc * cw_ref[1, 0]
    for c in range(1, C):
        xc = x_ref[:, c, :]
        acc0 = acc0 + xc * cw_ref[0, c]
        acc1 = acc1 + xc * cw_ref[1, c]

    # ReLU, then drop to bf16 for the MXU (f32 accumulation kept below).
    y0 = jnp.maximum(acc0 + cb_ref[0], 0.0).astype(jnp.bfloat16)   # (TB, HW)
    y1 = jnp.maximum(acc1 + cb_ref[1], 0.0).astype(jnp.bfloat16)   # (TB, HW)

    # Linear over the channel-major flatten(1):
    #   logits = concat(y0, y1) @ fc_w.T + b = y0 @ W0 + y1 @ W1 + b
    logits = (jnp.dot(y0, wfc_ref[0], preferred_element_type=jnp.float32)
              + jnp.dot(y1, wfc_ref[1], preferred_element_type=jnp.float32)
              + fcb_ref[...])                                      # (TB, HW) f32

    # log_softmax over dim=1 (numerically stable), f32 epilogue.
    m = jnp.max(logits, axis=-1, keepdims=True)
    z = logits - m
    lse = jnp.log(jnp.sum(jnp.exp(z), axis=-1, keepdims=True))
    o_ref[...] = z - lse


def policy_head_forward(x_nchw, params, *, tb_max=256):
    N, C, H, W = x_nchw.shape
    HW = H * W
    eps = 1e-5

    # Fold eval-mode BatchNorm into the 1x1 conv: y = scale*(Wx + b) + shift.
    scale = params["bn_gamma"] / jnp.sqrt(params["bn_var"] + eps)              # (2,)
    shift = params["bn_beta"] - params["bn_mean"] * scale                      # (2,)
    cw = (params["conv_w"].reshape(2, C) * scale[:, None]).astype(jnp.float32)  # (2, C)
    cb = (scale * params["conv_b"] + shift).astype(jnp.float32)                # (2,)

    # FC weight split for the channel-major flatten(1): logits = y0 @ W0 + y1 @ W1 + b.
    fc_w = params["fc_w"].astype(jnp.float32)                                  # (HW, 2*HW)
    wfc = jnp.stack([fc_w[:, :HW].T, fc_w[:, HW:].T]).astype(jnp.bfloat16)     # (2, HW, HW)
    fcb = params["fc_b"].reshape(1, HW).astype(jnp.float32)

    # Batch tiling: TB multiple of 8 (up to tb_max to fill the MXU M dim); pad N.
    TB = min(_round_up(tb_max, 8), _round_up(max(N, 1), 8))
    N_pad = _round_up(N, TB)
    x = x_nchw.reshape(N, C, HW).astype(jnp.float32)
    if N_pad != N:
        x = jnp.pad(x, ((0, N_pad - N), (0, 0), (0, 0)))

    out = pl.pallas_call(
        policy_head_kernel,
        out_shape=jax.ShapeDtypeStruct((N_pad, HW), jnp.float32),
        grid_spec=pltpu.PrefetchScalarGridSpec(
            num_scalar_prefetch=0,
            grid=(N_pad // TB,),
            in_specs=[
                pl.BlockSpec(memory_space=pltpu.MemorySpace.SMEM),   # cw (2, C)
                pl.BlockSpec(memory_space=pltpu.MemorySpace.SMEM),   # cb (2,)
                pl.BlockSpec((TB, C, HW), lambda i: (i, 0, 0)),      # x batch tile
                pl.BlockSpec((2, HW, HW), lambda i: (0, 0, 0)),      # fc weight (resident)
                pl.BlockSpec((1, HW), lambda i: (0, 0)),             # fc bias (resident)
            ],
            out_specs=pl.BlockSpec((TB, HW), lambda i: (i, 0)),
        ),
        compiler_params=pltpu.CompilerParams(
            dimension_semantics=("parallel",)),
    )(cw, cb, x, wfc, fcb)
    return out[:N]


def policy_head_reference(x_nchw, params):
    """Pure-JAX f32 reference mirroring the PyTorch forward (eval-mode BN)."""
    N, C, H, W = x_nchw.shape
    HW = H * W
    w = params["conv_w"].reshape(2, C)
    y = jnp.einsum("oc,nchw->nohw", w, x_nchw) + params["conv_b"].reshape(1, 2, 1, 1)
    eps = 1e-5
    scale = (params["bn_gamma"] / jnp.sqrt(params["bn_var"] + eps)).reshape(1, 2, 1, 1)
    shift = (params["bn_beta"] - params["bn_mean"] *
             params["bn_gamma"] / jnp.sqrt(params["bn_var"] + eps)).reshape(1, 2, 1, 1)
    y = jnp.maximum(y * scale + shift, 0.0)
    flat = y.reshape(N, 2 * HW)                                    # channel-major flatten(1)
    logits = flat @ params["fc_w"].T + params["fc_b"]
    return jax.nn.log_softmax(logits, axis=1)


if __name__ == "__main__":
    # Small shapes consistent with the module: batch=2, in_channels=8, board_len=8.
    batch, in_channels, board_len = 2, 8, 8
    HW = board_len * board_len

    key = jax.random.PRNGKey(0)
    ks = jax.random.split(key, 9)
    params = {
        "conv_w": 0.1 * jax.random.normal(ks[0], (2, in_channels, 1, 1), jnp.float32),
        "conv_b": 0.1 * jax.random.normal(ks[1], (2,), jnp.float32),
        "bn_gamma": 1.0 + 0.1 * jax.random.normal(ks[2], (2,), jnp.float32),
        "bn_beta": 0.1 * jax.random.normal(ks[3], (2,), jnp.float32),
        "bn_mean": 0.1 * jax.random.normal(ks[4], (2,), jnp.float32),
        "bn_var": 0.5 + jax.random.uniform(ks[5], (2,), jnp.float32),
        "fc_w": 0.05 * jax.random.normal(ks[6], (HW, 2 * HW), jnp.float32),
        "fc_b": 0.05 * jax.random.normal(ks[7], (HW,), jnp.float32),
    }

    x = jax.random.normal(ks[8], (batch, in_channels, board_len, board_len), jnp.float32)

    out = policy_head_forward(x, params)
    out = jax.block_until_ready(out)

    ref = policy_head_reference(x, params)
    assert out.shape == (batch, HW)
    # bf16 FC-matmul operands -> slightly looser tolerance vs. the f32 reference.
    assert jnp.allclose(out, ref, atol=2e-2, rtol=2e-2), "mismatch vs. reference"

    print("KERNEL_OK")
</pallas_src>

<mosaic_0001>
module attributes {stable_mosaic.version = 11 : i64} {
  func.func @policy_head_kernel(%arg0: i32, %arg1: memref<2x8xf32, #tpu.memory_space<smem>>, %arg2: memref<2xf32, #tpu.memory_space<smem>>, %arg3: memref<8x8x64xf32, #tpu.memory_space<vmem>>, %arg4: memref<2x64x64xbf16, #tpu.memory_space<vmem>>, %arg5: memref<1x64xf32, #tpu.memory_space<vmem>>, %arg6: memref<8x64xf32, #tpu.memory_space<vmem>>) attributes {dimension_semantics = [#tpu.dimension_semantics<parallel>], iteration_bounds = array<i64: 1>, scalar_prefetch = 0 : i64, scratch_operands = 0 : i64, tpu.core_type = #tpu.core_type<tc>, window_params = [{transform_indices = @transform_0, window_bounds = array<i64: 2, 8>}, {transform_indices = @transform_1, window_bounds = array<i64: 2>}, {transform_indices = @transform_2, window_bounds = array<i64: 8, 8, 64>}, {pipeline_mode = #tpu.pipeline_mode<synchronous>, transform_indices = @transform_3, window_bounds = array<i64: 2, 64, 64>}, {pipeline_mode = #tpu.pipeline_mode<synchronous>, transform_indices = @transform_4, window_bounds = array<i64: 1, 64>}, {transform_indices = @transform_5, window_bounds = array<i64: 8, 64>}]} {
    %c0 = arith.constant 0 : index
    %c0_0 = arith.constant 0 : index
    %c0_1 = arith.constant 0 : index
    %0 = vector.load %arg3[%c0, %c0_0, %c0_1] : memref<8x8x64xf32, #tpu.memory_space<vmem>>, vector<8x1x64xf32>
    %1 = vector.shape_cast %0 : vector<8x1x64xf32> to vector<8x64xf32>
    %c0_2 = arith.constant 0 : index
    %c0_3 = arith.constant 0 : index
    %2 = memref.load %arg1[%c0_2, %c0_3] : memref<2x8xf32, #tpu.memory_space<smem>>
    %3 = vector.broadcast %2 : f32 to vector<8x64xf32>
    %4 = arith.mulf %1, %3 : vector<8x64xf32>
    %c1 = arith.constant 1 : index
    %c0_4 = arith.constant 0 : index
    %5 = memref.load %arg1[%c1, %c0_4] : memref<2x8xf32, #tpu.memory_space<smem>>
    %6 = vector.broadcast %5 : f32 to vector<8x64xf32>
    %7 = arith.mulf %1, %6 : vector<8x64xf32>
    %c0_5 = arith.constant 0 : index
    %c1_6 = arith.constant 1 : index
    %c0_7 = arith.constant 0 : index
    %8 = vector.load %arg3[%c0_5, %c1_6, %c0_7] : memref<8x8x64xf32, #tpu.memory_space<vmem>>, vector<8x1x64xf32>
    %9 = vector.shape_cast %8 : vector<8x1x64xf32> to vector<8x64xf32>
    %c0_8 = arith.constant 0 : index
    %c1_9 = arith.constant 1 : index
    %10 = memref.load %arg1[%c0_8, %c1_9] : memref<2x8xf32, #tpu.memory_space<smem>>
    %11 = vector.broadcast %10 : f32 to vector<8x64xf32>
    %12 = arith.mulf %9, %11 : vector<8x64xf32>
    %13 = arith.addf %4, %12 : vector<8x64xf32>
    %c1_10 = arith.constant 1 : index
    %c1_11 = arith.constant 1 : index
    %14 = memref.load %arg1[%c1_10, %c1_11] : memref<2x8xf32, #tpu.memory_space<smem>>
    %15 = vector.broadcast %14 : f32 to vector<8x64xf32>
    %16 = arith.mulf %9, %15 : vector<8x64xf32>
    %17 = arith.addf %7, %16 : vector<8x64xf32>
    %c0_12 = arith.constant 0 : index
    %c2 = arith.constant 2 : index
    %c0_13 = arith.constant 0 : index
    %18 = vector.load %arg3[%c0_12, %c2, %c0_13] : memref<8x8x64xf32, #tpu.memory_space<vmem>>, vector<8x1x64xf32>
    %19 = vector.shape_cast %18 : vector<8x1x64xf32> to vector<8x64xf32>
    %c0_14 = arith.constant 0 : index
    %c2_15 = arith.constant 2 : index
    %20 = memref.load %arg1[%c0_14, %c2_15] : memref<2x8xf32, #tpu.memory_space<smem>>
    %21 = vector.broadcast %20 : f32 to vector<8x64xf32>
    %22 = arith.mulf %19, %21 : vector<8x64xf32>
    %23 = arith.addf %13, %22 : vector<8x64xf32>
    %c1_16 = arith.constant 1 : index
    %c2_17 = arith.constant 2 : index
    %24 = memref.load %arg1[%c1_16, %c2_17] : memref<2x8xf32, #tpu.memory_space<smem>>
    %25 = vector.broadcast %24 : f32 to vector<8x64xf32>
    %26 = arith.mulf %19, %25 : vector<8x64xf32>
    %27 = arith.addf %17, %26 : vector<8x64xf32>
    %c0_18 = arith.constant 0 : index
    %c3 = arith.constant 3 : index
    %c0_19 = arith.constant 0 : index
    %28 = vector.load %arg3[%c0_18, %c3, %c0_19] : memref<8x8x64xf32, #tpu.memory_space<vmem>>, vector<8x1x64xf32>
    %29 = vector.shape_cast %28 : vector<8x1x64xf32> to vector<8x64xf32>
    %c0_20 = arith.constant 0 : index
    %c3_21 = arith.constant 3 : index
    %30 = memref.load %arg1[%c0_20, %c3_21] : memref<2x8xf32, #tpu.memory_space<smem>>
    %31 = vector.broadcast %30 : f32 to vector<8x64xf32>
    %32 = arith.mulf %29, %31 : vector<8x64xf32>
    %33 = arith.addf %23, %32 : vector<8x64xf32>
    %c1_22 = arith.constant 1 : index
    %c3_23 = arith.constant 3 : index
    %34 = memref.load %arg1[%c1_22, %c3_23] : memref<2x8xf32, #tpu.memory_space<smem>>
    %35 = vector.broadcast %34 : f32 to vector<8x64xf32>
    %36 = arith.mulf %29, %35 : vector<8x64xf32>
    %37 = arith.addf %27, %36 : vector<8x64xf32>
    %c0_24 = arith.constant 0 : index
    %c4 = arith.constant 4 : index
    %c0_25 = arith.constant 0 : index
    %38 = vector.load %arg3[%c0_24, %c4, %c0_25] : memref<8x8x64xf32, #tpu.memory_space<vmem>>, vector<8x1x64xf32>
    %39 = vector.shape_cast %38 : vector<8x1x64xf32> to vector<8x64xf32>
    %c0_26 = arith.constant 0 : index
    %c4_27 = arith.constant 4 : index
    %40 = memref.load %arg1[%c0_26, %c4_27] : memref<2x8xf32, #tpu.memory_space<smem>>
    %41 = vector.broadcast %40 : f32 to vector<8x64xf32>
    %42 = arith.mulf %39, %41 : vector<8x64xf32>
    %43 = arith.addf %33, %42 : vector<8x64xf32>
    %c1_28 = arith.constant 1 : index
    %c4_29 = arith.constant 4 : index
    %44 = memref.load %arg1[%c1_28, %c4_29] : memref<2x8xf32, #tpu.memory_space<smem>>
    %45 = vector.broadcast %44 : f32 to vector<8x64xf32>
    %46 = arith.mulf %39, %45 : vector<8x64xf32>
    %47 = arith.addf %37, %46 : vector<8x64xf32>
    %c0_30 = arith.constant 0 : index
    %c5 = arith.constant 5 : index
    %c0_31 = arith.constant 0 : index
    %48 = vector.load %arg3[%c0_30, %c5, %c0_31] : memref<8x8x64xf32, #tpu.memory_space<vmem>>, vector<8x1x64xf32>
    %49 = vector.shape_cast %48 : vector<8x1x64xf32> to vector<8x64xf32>
    %c0_32 = arith.constant 0 : index
    %c5_33 = arith.constant 5 : index
    %50 = memref.load %arg1[%c0_32, %c5_33] : memref<2x8xf32, #tpu.memory_space<smem>>
    %51 = vector.broadcast %50 : f32 to vector<8x64xf32>
    %52 = arith.mulf %49, %51 : vector<8x64xf32>
    %53 = arith.addf %43, %52 : vector<8x64xf32>
    %c1_34 = arith.constant 1 : index
    %c5_35 = arith.constant 5 : index
    %54 = memref.load %arg1[%c1_34, %c5_35] : memref<2x8xf32, #tpu.memory_space<smem>>
    %55 = vector.broadcast %54 : f32 to vector<8x64xf32>
    %56 = arith.mulf %49, %55 : vector<8x64xf32>
    %57 = arith.addf %47, %56 : vector<8x64xf32>
    %c0_36 = arith.constant 0 : index
    %c6 = arith.constant 6 : index
    %c0_37 = arith.constant 0 : index
    %58 = vector.load %arg3[%c0_36, %c6, %c0_37] : memref<8x8x64xf32, #tpu.memory_space<vmem>>, vector<8x1x64xf32>
    %59 = vector.shape_cast %58 : vector<8x1x64xf32> to vector<8x64xf32>
    %c0_38 = arith.constant 0 : index
    %c6_39 = arith.constant 6 : index
    %60 = memref.load %arg1[%c0_38, %c6_39] : memref<2x8xf32, #tpu.memory_space<smem>>
    %61 = vector.broadcast %60 : f32 to vector<8x64xf32>
    %62 = arith.mulf %59, %61 : vector<8x64xf32>
    %63 = arith.addf %53, %62 : vector<8x64xf32>
    %c1_40 = arith.constant 1 : index
    %c6_41 = arith.constant 6 : index
    %64 = memref.load %arg1[%c1_40, %c6_41] : memref<2x8xf32, #tpu.memory_space<smem>>
    %65 = vector.broadcast %64 : f32 to vector<8x64xf32>
    %66 = arith.mulf %59, %65 : vector<8x64xf32>
    %67 = arith.addf %57, %66 : vector<8x64xf32>
    %c0_42 = arith.constant 0 : index
    %c7 = arith.constant 7 : index
    %c0_43 = arith.constant 0 : index
    %68 = vector.load %arg3[%c0_42, %c7, %c0_43] : memref<8x8x64xf32, #tpu.memory_space<vmem>>, vector<8x1x64xf32>
    %69 = vector.shape_cast %68 : vector<8x1x64xf32> to vector<8x64xf32>
    %c0_44 = arith.constant 0 : index
    %c7_45 = arith.constant 7 : index
    %70 = memref.load %arg1[%c0_44, %c7_45] : memref<2x8xf32, #tpu.memory_space<smem>>
    %71 = vector.broadcast %70 : f32 to vector<8x64xf32>
    %72 = arith.mulf %69, %71 : vector<8x64xf32>
    %73 = arith.addf %63, %72 : vector<8x64xf32>
    %c1_46 = arith.constant 1 : index
    %c7_47 = arith.constant 7 : index
    %74 = memref.load %arg1[%c1_46, %c7_47] : memref<2x8xf32, #tpu.memory_space<smem>>
    %75 = vector.broadcast %74 : f32 to vector<8x64xf32>
    %76 = arith.mulf %69, %75 : vector<8x64xf32>
    %77 = arith.addf %67, %76 : vector<8x64xf32>
    %c0_48 = arith.constant 0 : index
    %78 = memref.load %arg2[%c0_48] : memref<2xf32, #tpu.memory_space<smem>>
    %79 = vector.broadcast %78 : f32 to vector<8x64xf32>
    %80 = arith.addf %73, %79 : vector<8x64xf32>
    %cst = arith.constant 0.000000e+00 : f32
    %81 = vector.broadcast %cst : f32 to vector<8x64xf32>
    %82 = arith.maximumf %80, %81 : vector<8x64xf32>
    %83 = arith.truncf %82 : vector<8x64xf32> to vector<8x64xbf16>
    %c1_49 = arith.constant 1 : index
    %84 = memref.load %arg2[%c1_49] : memref<2xf32, #tpu.memory_space<smem>>
    %85 = vector.broadcast %84 : f32 to vector<8x64xf32>
    %86 = arith.addf %77, %85 : vector<8x64xf32>
    %cst_50 = arith.constant 0.000000e+00 : f32
    %87 = vector.broadcast %cst_50 : f32 to vector<8x64xf32>
    %88 = arith.maximumf %86, %87 : vector<8x64xf32>
    %89 = arith.truncf %88 : vector<8x64xf32> to vector<8x64xbf16>
    %c0_51 = arith.constant 0 : index
    %c0_52 = arith.constant 0 : index
    %c0_53 = arith.constant 0 : index
    %90 = vector.load %arg4[%c0_51, %c0_52, %c0_53] : memref<2x64x64xbf16, #tpu.memory_space<vmem>>, vector<1x64x64xbf16>
    %91 = vector.shape_cast %90 : vector<1x64x64xbf16> to vector<64x64xbf16>
    %cst_54 = arith.constant dense<0.000000e+00> : vector<8x64xf32>
    %92 = tpu.matmul %83, %91, %cst_54 {dimension_numbers = #tpu.dot_dimension_numbers<[1], [0], [0], [1], [0, 0, 1, 1], [], []>} : vector<8x64xbf16>, vector<64x64xbf16>, vector<8x64xf32> -> vector<8x64xf32>
    %c1_55 = arith.constant 1 : index
    %c0_56 = arith.constant 0 : index
    %c0_57 = arith.constant 0 : index
    %93 = vector.load %arg4[%c1_55, %c0_56, %c0_57] : memref<2x64x64xbf16, #tpu.memory_space<vmem>>, vector<1x64x64xbf16>
    %94 = vector.shape_cast %93 : vector<1x64x64xbf16> to vector<64x64xbf16>
    %cst_58 = arith.constant dense<0.000000e+00> : vector<8x64xf32>
    %95 = tpu.matmul %89, %94, %cst_58 {dimension_numbers = #tpu.dot_dimension_numbers<[1], [0], [0], [1], [0, 0, 1, 1], [], []>} : vector<8x64xbf16>, vector<64x64xbf16>, vector<8x64xf32> -> vector<8x64xf32>
    %96 = arith.addf %92, %95 : vector<8x64xf32>
    %c0_59 = arith.constant 0 : index
    %c0_60 = arith.constant 0 : index
    %97 = vector.load %arg5[%c0_59, %c0_60] : memref<1x64xf32, #tpu.memory_space<vmem>>, vector<1x64xf32>
    %98 = vector.broadcast %97 : vector<1x64xf32> to vector<8x64xf32>
    %99 = arith.addf %96, %98 : vector<8x64xf32>
    %cst_61 = arith.constant dense<0xFF800000> : vector<8xf32>
    %100 = vector.multi_reduction <maximumf>, %99, %cst_61 [1] : vector<8x64xf32> to vector<8xf32>
    %101 = vector.shape_cast %100 : vector<8xf32> to vector<8x1xf32>
    %102 = vector.broadcast %101 : vector<8x1xf32> to vector<8x64xf32>
    %103 = arith.subf %99, %102 : vector<8x64xf32>
    %104 = math.exp %103 : vector<8x64xf32>
    %cst_62 = arith.constant dense<0.000000e+00> : vector<8xf32>
    %105 = vector.multi_reduction <add>, %104, %cst_62 [1] : vector<8x64xf32> to vector<8xf32>
    %106 = vector.shape_cast %105 : vector<8xf32> to vector<8x1xf32>
    %107 = math.log %106 : vector<8x1xf32>
    %108 = vector.broadcast %107 : vector<8x1xf32> to vector<8x64xf32>
    %109 = arith.subf %103, %108 : vector<8x64xf32>
    %c0_63 = arith.constant 0 : index
    %c0_64 = arith.constant 0 : index
    %110 = vector.load %arg6[%c0_63, %c0_64] : memref<8x64xf32, #tpu.memory_space<vmem>>, vector<8x64xf32>
    tpu.vector_store %arg6[%c0_63, %c0_64], %109 {strides = array<i32>} : memref<8x64xf32, #tpu.memory_space<vmem>>, vector<8x64xf32>,
    return
  }
  func.func @transform_0(%arg0: i32) -> (i32, i32) {
    %c0_i32 = arith.constant 0 : i32
    %c0_i32_0 = arith.constant 0 : i32
    %c0_i32_1 = arith.constant 0 : i32
    return %c0_i32, %c0_i32_0 : i32, i32
  }
  func.func @transform_1(%arg0: i32) -> i32 {
    %c0_i32 = arith.constant 0 : i32
    %c0_i32_0 = arith.constant 0 : i32
    return %c0_i32 : i32
  }
  func.func @transform_2(%arg0: i32) -> (i32, i32, i32) {
    %c0_i32 = arith.constant 0 : i32
    %c0_i32_0 = arith.constant 0 : i32
    %c0_i32_1 = arith.constant 0 : i32
    return %arg0, %c0_i32, %c0_i32_0 : i32, i32, i32
  }
  func.func @transform_3(%arg0: i32) -> (i32, i32, i32) {
    %c0_i32 = arith.constant 0 : i32
    %c0_i32_0 = arith.constant 0 : i32
    %c0_i32_1 = arith.constant 0 : i32
    %c0_i32_2 = arith.constant 0 : i32
    return %c0_i32, %c0_i32_0, %c0_i32_1 : i32, i32, i32
  }
  func.func @transform_4(%arg0: i32) -> (i32, i32) {
    %c0_i32 = arith.constant 0 : i32
    %c0_i32_0 = arith.constant 0 : i32
    %c0_i32_1 = arith.constant 0 : i32
    return %c0_i32, %c0_i32_0 : i32, i32
  }
  func.func @transform_5(%arg0: i32) -> (i32, i32) {
    %c0_i32 = arith.constant 0 : i32
    %c0_i32_0 = arith.constant 0 : i32
    return %arg0, %c0_i32 : i32, i32
  }
}

</mosaic_0001>

<llo_original>
// kernel: tpu_custom_call.1
$region0: #{tpu_custom_call.1}
  #allocation0 [shape = 'u32[]', space=smem, size = 0x4, offset = 0x4, fixed_abs, tag = 'smem constant byte address 0x4 - core index']
  #allocation1 [shape = 'u32[72,128]{1,0:T(1,128)}', space=vmem, size = 0x9000, scoped, tag = 'internal scratch']
  %s0 = inlined_call_operand.hbm [shape: f32[2,8], index: 0, kind: input, shape index: {}]
  %s1 = inlined_call_operand.hbm [shape: f32[2], index: 1, kind: input, shape index: {}]
  %s2 = inlined_call_operand.hbm [shape: f32[8,8,64], index: 2, kind: input, shape index: {}]
  %s3 = inlined_call_operand.hbm [shape: bf16[2,64,64], index: 3, kind: input, shape index: {}]
  %s4 = inlined_call_operand.vmem [shape: f32[1,64], index: 4, kind: input, shape index: {}]
  %s5 = inlined_call_operand.hbm [shape: f32[8,64], index: 5, kind: output, shape index: {}]
  %s6 = sld [smem:[#allocation0]]
  $region46: #{tpu_custom_call.1} parent=0
    _
  %s8 = ssub.s32 1, %s6
  %s9 = scalar_select 0, %s8, %s6
  $region1: #{tpu_custom_call.1} parent=0
    #allocation2 [shape = 'u8[1024]{0}', space=smem, size = 0x400, scoped, tag = 'input window, operand 0, single buffered']
    #allocation3 [shape = 's32[1]{0}', space=sflag, size = 0x4, scoped, tag = 'scoped memory for tpu_custom_call.1']
    #allocation4 [shape = 's32[1]{0}', space=sflag, size = 0x4, scoped, tag = 'scoped memory for tpu_custom_call.1']
    #allocation5 [shape = 's32[1]{0}', space=sflag, size = 0x4, scoped, tag = 'scoped memory for tpu_custom_call.1']
    #allocation6 [shape = 'u8[512]{0}', space=smem, size = 0x200, scoped, tag = 'input window, operand 1, single buffered']
    #allocation7 [shape = 's32[1]{0}', space=sflag, size = 0x4, scoped, tag = 'scoped memory for tpu_custom_call.1']
    #allocation8 [shape = 'u8[32768]{0}', space=vmem, size = 0x8000, scoped, tag = 'input window, operand 2, single buffered']
    #allocation9 [shape = 'u8[32768]{0}', space=vmem, size = 0x8000, scoped, tag = 'input window, operand 3, single buffered']
    #allocation10 [shape = 's32[1]{0}', space=sflag, size = 0x4, scoped, tag = 'scoped memory for tpu_custom_call.1']
    #allocation11 [shape = 'u8[4096]{0}', space=vmem, size = 0x1000, scoped, tag = 'output window, operand 0, single buffered']
    %10 = vsyncpa [#allocation5], 0
    %11 = vsyncpa [#allocation7], 0
    %12 = vsyncpa [#allocation3], 0
    %13 = vsyncpa [#allocation10], 0
    %14 = vsyncpa [#allocation4], 0
    // Predicated region
    $region2: #{tpu_custom_call.1} parent=1 // pred_check
      _
    $region3: #{tpu_custom_call.1} parent=1 // pred_check_branch
      %16 = sbr.rel (0) target = $region5
    $region4: #{tpu_custom_call.1} parent=1 // pred_region
      %18 = vsyncadd [#allocation5], 0
      %s20 = sshll.u32 %s0, 4
      %s21 = int_to_ptr.hbm [resolvable:$true] %s20
      %23 = dma.hbm_to_smem %s21, 32, [#allocation2], [#allocation5]
    $region5: #{tpu_custom_call.1} parent=1 // pred_fallthru
      _
    // Predicated region
    $region6: #{tpu_custom_call.1} parent=1 // pred_check
      _
    $region7: #{tpu_custom_call.1} parent=1 // pred_check_branch
      %25 = sbr.rel (0) target = $region9
    $region8: #{tpu_custom_call.1} parent=1 // pred_region
      %27 = vsyncadd [#allocation7], 0
      %s29 = sshll.u32 %s1, 4
      %s30 = int_to_ptr.hbm [resolvable:$true] %s29
      %32 = dma.hbm_to_smem %s30, 16, [#allocation6], [#allocation7]
    $region9: #{tpu_custom_call.1} parent=1 // pred_fallthru
      _
    // Predicated region
    $region10: #{tpu_custom_call.1} parent=1 // pred_check
      _
    $region11: #{tpu_custom_call.1} parent=1 // pred_check_branch
      %34 = sbr.rel (0) target = $region13
    $region12: #{tpu_custom_call.1} parent=1 // pred_region
      %36 = vsyncadd [#allocation3], 0
      %s37 = sshll.u32 %s2, 4
      %s38 = int_to_ptr.hbm [resolvable:$true] %s37
      %s39 = sshll.u32 [#allocation8], 4
      %s40 = int_to_ptr.vmem [resolvable:$true] %s39
      %45 = dma.hbm_to_vmem [thread:$0]  %s38, 1024, %s40, [#allocation3], 128, 128, 8
    $region13: #{tpu_custom_call.1} parent=1 // pred_fallthru
      _
    // Predicated region
    $region14: #{tpu_custom_call.1} parent=1 // pred_check
      _
    $region15: #{tpu_custom_call.1} parent=1 // pred_check_branch
      %47 = sbr.rel (0) target = $region17
    $region16: #{tpu_custom_call.1} parent=1 // pred_region
      %49 = vsyncadd [#allocation10], 0
      %s50 = sshll.u32 %s3, 4
      %s51 = int_to_ptr.hbm [resolvable:$true] %s50
      %s52 = sshll.u32 [#allocation9], 4
      %s53 = int_to_ptr.vmem [resolvable:$true] %s52
      %58 = dma.hbm_to_vmem [thread:$0]  %s51, 1024, %s53, [#allocation10], 64, 64, 4
    $region17: #{tpu_custom_call.1} parent=1 // pred_fallthru
      _
    // Predicated region
    $region18: #{tpu_custom_call.1} parent=1 // pred_check
      _
    $region19: #{tpu_custom_call.1} parent=1 // pred_check_branch
      %60 = sbr.rel (0) target = $region21
    $region20: #{tpu_custom_call.1} parent=1 // pred_region
      _
    $region21: #{tpu_custom_call.1} parent=1 // pred_fallthru
      _
    // Predicated region
    $region22: #{tpu_custom_call.1} parent=1 // pred_check
      _
    $region23: #{tpu_custom_call.1} parent=1 // pred_check_branch
      %62 = sbr.rel (0) target = $region25
    $region24: #{tpu_custom_call.1} parent=1 // pred_region
      %64 = dma.done [#allocation5], 32
    $region25: #{tpu_custom_call.1} parent=1 // pred_fallthru
      _
    // Predicated region
    $region26: #{tpu_custom_call.1} parent=1 // pred_check
      _
    $region27: #{tpu_custom_call.1} parent=1 // pred_check_branch
      %66 = sbr.rel (0) target = $region29
    $region28: #{tpu_custom_call.1} parent=1 // pred_region
      %68 = dma.done [#allocation7], 16
    $region29: #{tpu_custom_call.1} parent=1 // pred_fallthru
      _
    // Predicated region
    $region30: #{tpu_custom_call.1} parent=1 // pred_check
      _
    $region31: #{tpu_custom_call.1} parent=1 // pred_check_branch
      %70 = sbr.rel (0) target = $region33
    $region32: #{tpu_custom_call.1} parent=1 // pred_region
      %72 = dma.done [#allocation3], 1024
    $region33: #{tpu_custom_call.1} parent=1 // pred_fallthru
      _
    // Predicated region
    $region34: #{tpu_custom_call.1} parent=1 // pred_check
      _
    $region35: #{tpu_custom_call.1} parent=1 // pred_check_branch
      %74 = sbr.rel (0) target = $region37
    $region36: #{tpu_custom_call.1} parent=1 // pred_region
      %76 = dma.done [#allocation10], 1024
    $region37: #{tpu_custom_call.1} parent=1 // pred_fallthru
      _
    %77 = sfence
    %v79 = vld [vmem:[#allocation8] sm:$0x1]
    %v80 = vld [vmem:[#allocation8 + $0x8] sm:$0x1]
    %v81 = vld [vmem:[#allocation8 + $0x10] sm:$0x1]
    %v82 = vld [vmem:[#allocation8 + $0x18] sm:$0x1]
    %v83 = vld [vmem:[#allocation8 + $0x20] sm:$0x1]
    %v84 = vld [vmem:[#allocation8 + $0x28] sm:$0x1]
    %v85 = vld [vmem:[#allocation8 + $0x30] sm:$0x1]
    %v86 = vld [vmem:[#allocation8 + $0x38] sm:$0x1]
    %s87 = sld [smem:[#allocation2]]
    %v88 = vstv %s87
    %v89 = vmul.f32 %v79, %v88
    %v90 = vmul.f32 %v80, %v88
    %v91 = vmul.f32 %v81, %v88
    %v92 = vmul.f32 %v82, %v88
    %v93 = vmul.f32 %v83, %v88
    %v94 = vmul.f32 %v84, %v88
    %v95 = vmul.f32 %v85, %v88
    %v96 = vmul.f32 %v86, %v88
    %s97 = sld [smem:[#allocation2 + $0x80]]
    %v98 = vstv %s97
    %v99 = vmul.f32 %v79, %v98
    %v100 = vmul.f32 %v80, %v98
    %v101 = vmul.f32 %v81, %v98
    %v102 = vmul.f32 %v82, %v98
    %v103 = vmul.f32 %v83, %v98
    %v104 = vmul.f32 %v84, %v98
    %v105 = vmul.f32 %v85, %v98
    %v106 = vmul.f32 %v86, %v98
    %v107 = vld [vmem:[#allocation8 + $0x1] sm:$0x1]
    %v108 = vld [vmem:[#allocation8 + $0x9] sm:$0x1]
    %v109 = vld [vmem:[#allocation8 + $0x11] sm:$0x1]
    %v110 = vld [vmem:[#allocation8 + $0x19] sm:$0x1]
    %v111 = vld [vmem:[#allocation8 + $0x21] sm:$0x1]
    %v112 = vld [vmem:[#allocation8 + $0x29] sm:$0x1]
    %v113 = vld [vmem:[#allocation8 + $0x31] sm:$0x1]
    %v114 = vld [vmem:[#allocation8 + $0x39] sm:$0x1]
    %s115 = sld [smem:[#allocation2 + $0x1]]
    %v116 = vstv %s115
    %v117 = vmul.f32 %v107, %v116
    %v118 = vmul.f32 %v108, %v116
    %v119 = vmul.f32 %v109, %v116
    %v120 = vmul.f32 %v110, %v116
    %v121 = vmul.f32 %v111, %v116
    %v122 = vmul.f32 %v112, %v116
    %v123 = vmul.f32 %v113, %v116
    %v124 = vmul.f32 %v114, %v116
    %v125 = vadd.f32 %v89, %v117
    %v126 = vadd.f32 %v90, %v118
    %v127 = vadd.f32 %v91, %v119
    %v128 = vadd.f32 %v92, %v120
    %v129 = vadd.f32 %v93, %v121
    %v130 = vadd.f32 %v94, %v122
    %v131 = vadd.f32 %v95, %v123
    %v132 = vadd.f32 %v96, %v124
    %s133 = sld [smem:[#allocation2 + $0x81]]
    %v134 = vstv %s133
    %v135 = vmul.f32 %v107, %v134
    %v136 = vmul.f32 %v108, %v134
    %v137 = vmul.f32 %v109, %v134
    %v138 = vmul.f32 %v110, %v134
    %v139 = vmul.f32 %v111, %v134
    %v140 = vmul.f32 %v112, %v134
    %v141 = vmul.f32 %v113, %v134
    %v142 = vmul.f32 %v114, %v134
    %v143 = vadd.f32 %v99, %v135
    %v144 = vadd.f32 %v100, %v136
    %v145 = vadd.f32 %v101, %v137
    %v146 = vadd.f32 %v102, %v138
    %v147 = vadd.f32 %v103, %v139
    %v148 = vadd.f32 %v104, %v140
    %v149 = vadd.f32 %v105, %v141
    %v150 = vadd.f32 %v106, %v142
    %v151 = vld [vmem:[#allocation8 + $0x2] sm:$0x1]
    %v152 = vld [vmem:[#allocation8 + $0xa] sm:$0x1]
    %v153 = vld [vmem:[#allocation8 + $0x12] sm:$0x1]
    %v154 = vld [vmem:[#allocation8 + $0x1a] sm:$0x1]
    %v155 = vld [vmem:[#allocation8 + $0x22] sm:$0x1]
    %v156 = vld [vmem:[#allocation8 + $0x2a] sm:$0x1]
    %v157 = vld [vmem:[#allocation8 + $0x32] sm:$0x1]
    %v158 = vld [vmem:[#allocation8 + $0x3a] sm:$0x1]
    %s159 = sld [smem:[#allocation2 + $0x2]]
    %v160 = vstv %s159
    %v161 = vmul.f32 %v151, %v160
    %v162 = vmul.f32 %v152, %v160
    %v163 = vmul.f32 %v153, %v160
    %v164 = vmul.f32 %v154, %v160
    %v165 = vmul.f32 %v155, %v160
    %v166 = vmul.f32 %v156, %v160
    %v167 = vmul.f32 %v157, %v160
    %v168 = vmul.f32 %v158, %v160
    %v169 = vadd.f32 %v125, %v161
    %v170 = vadd.f32 %v126, %v162
    %v171 = vadd.f32 %v127, %v163
    %v172 = vadd.f32 %v128, %v164
    %v173 = vadd.f32 %v129, %v165
    %v174 = vadd.f32 %v130, %v166
    %v175 = vadd.f32 %v131, %v167
    %v176 = vadd.f32 %v132, %v168
    %s177 = sld [smem:[#allocation2 + $0x82]]
    %v178 = vstv %s177
    %v179 = vmul.f32 %v151, %v178
    %v180 = vmul.f32 %v152, %v178
    %v181 = vmul.f32 %v153, %v178
    %v182 = vmul.f32 %v154, %v178
    %v183 = vmul.f32 %v155, %v178
    %v184 = vmul.f32 %v156, %v178
    %v185 = vmul.f32 %v157, %v178
    %v186 = vmul.f32 %v158, %v178
    %v187 = vadd.f32 %v143, %v179
    %v188 = vadd.f32 %v144, %v180
    %v189 = vadd.f32 %v145, %v181
    %v190 = vadd.f32 %v146, %v182
    %v191 = vadd.f32 %v147, %v183
    %v192 = vadd.f32 %v148, %v184
    %v193 = vadd.f32 %v149, %v185
    %v194 = vadd.f32 %v150, %v186
    %v195 = vld [vmem:[#allocation8 + $0x3] sm:$0x1]
    %v196 = vld [vmem:[#allocation8 + $0xb] sm:$0x1]
    %v197 = vld [vmem:[#allocation8 + $0x13] sm:$0x1]
    %v198 = vld [vmem:[#allocation8 + $0x1b] sm:$0x1]
    %v199 = vld [vmem:[#allocation8 + $0x23] sm:$0x1]
    %v200 = vld [vmem:[#allocation8 + $0x2b] sm:$0x1]
    %v201 = vld [vmem:[#allocation8 + $0x33] sm:$0x1]
    %v202 = vld [vmem:[#allocation8 + $0x3b] sm:$0x1]
    %s203 = sld [smem:[#allocation2 + $0x3]]
    %v204 = vstv %s203
    %v205 = vmul.f32 %v195, %v204
    %v206 = vmul.f32 %v196, %v204
    %v207 = vmul.f32 %v197, %v204
    %v208 = vmul.f32 %v198, %v204
    %v209 = vmul.f32 %v199, %v204
    %v210 = vmul.f32 %v200, %v204
    %v211 = vmul.f32 %v201, %v204
    %v212 = vmul.f32 %v202, %v204
    %v213 = vadd.f32 %v169, %v205
    %v214 = vadd.f32 %v170, %v206
    %v215 = vadd.f32 %v171, %v207
    %v216 = vadd.f32 %v172, %v208
    %v217 = vadd.f32 %v173, %v209
    %v218 = vadd.f32 %v174, %v210
    %v219 = vadd.f32 %v175, %v211
    %v220 = vadd.f32 %v176, %v212
    %s221 = sld [smem:[#allocation2 + $0x83]]
    %v222 = vstv %s221
    %v223 = vmul.f32 %v195, %v222
    %v224 = vmul.f32 %v196, %v222
    %v225 = vmul.f32 %v197, %v222
    %v226 = vmul.f32 %v198, %v222
    %v227 = vmul.f32 %v199, %v222
    %v228 = vmul.f32 %v200, %v222
    %v229 = vmul.f32 %v201, %v222
    %v230 = vmul.f32 %v202, %v222
    %v231 = vadd.f32 %v187, %v223
    %v232 = vadd.f32 %v188, %v224
    %v233 = vadd.f32 %v189, %v225
    %v234 = vadd.f32 %v190, %v226
    %v235 = vadd.f32 %v191, %v227
    %v236 = vadd.f32 %v192, %v228
    %v237 = vadd.f32 %v193, %v229
    %v238 = vadd.f32 %v194, %v230
    %v239 = vld [vmem:[#allocation8 + $0x4] sm:$0x1]
    %v240 = vld [vmem:[#allocation8 + $0xc] sm:$0x1]
    %v241 = vld [vmem:[#allocation8 + $0x14] sm:$0x1]
    %v242 = vld [vmem:[#allocation8 + $0x1c] sm:$0x1]
    %v243 = vld [vmem:[#allocation8 + $0x24] sm:$0x1]
    %v244 = vld [vmem:[#allocation8 + $0x2c] sm:$0x1]
    %v245 = vld [vmem:[#allocation8 + $0x34] sm:$0x1]
    %v246 = vld [vmem:[#allocation8 + $0x3c] sm:$0x1]
    %s247 = sld [smem:[#allocation2 + $0x4]]
    %v248 = vstv %s247
    %v249 = vmul.f32 %v239, %v248
    %v250 = vmul.f32 %v240, %v248
    %v251 = vmul.f32 %v241, %v248
    %v252 = vmul.f32 %v242, %v248
    %v253 = vmul.f32 %v243, %v248
    %v254 = vmul.f32 %v244, %v248
    %v255 = vmul.f32 %v245, %v248
    %v256 = vmul.f32 %v246, %v248
    %v257 = vadd.f32 %v213, %v249
    %v258 = vadd.f32 %v214, %v250
    %v259 = vadd.f32 %v215, %v251
    %v260 = vadd.f32 %v216, %v252
    %v261 = vadd.f32 %v217, %v253
    %v262 = vadd.f32 %v218, %v254
    %v263 = vadd.f32 %v219, %v255
    %v264 = vadd.f32 %v220, %v256
    %s265 = sld [smem:[#allocation2 + $0x84]]
    %v266 = vstv %s265
    %v267 = vmul.f32 %v239, %v266
    %v268 = vmul.f32 %v240, %v266
    %v269 = vmul.f32 %v241, %v266
    %v270 = vmul.f32 %v242, %v266
    %v271 = vmul.f32 %v243, %v266
    %v272 = vmul.f32 %v244, %v266
    %v273 = vmul.f32 %v245, %v266
    %v274 = vmul.f32 %v246, %v266
    %v275 = vadd.f32 %v231, %v267
    %v276 = vadd.f32 %v232, %v268
    %v277 = vadd.f32 %v233, %v269
    %v278 = vadd.f32 %v234, %v270
    %v279 = vadd.f32 %v235, %v271
    %v280 = vadd.f32 %v236, %v272
    %v281 = vadd.f32 %v237, %v273
    %v282 = vadd.f32 %v238, %v274
    %v283 = vld [vmem:[#allocation8 + $0x5] sm:$0x1]
    %v284 = vld [vmem:[#allocation8 + $0xd] sm:$0x1]
    %v285 = vld [vmem:[#allocation8 + $0x15] sm:$0x1]
    %v286 = vld [vmem:[#allocation8 + $0x1d] sm:$0x1]
    %v287 = vld [vmem:[#allocation8 + $0x25] sm:$0x1]
    %v288 = vld [vmem:[#allocation8 + $0x2d] sm:$0x1]
    %v289 = vld [vmem:[#allocation8 + $0x35] sm:$0x1]
    %v290 = vld [vmem:[#allocation8 + $0x3d] sm:$0x1]
    %s291 = sld [smem:[#allocation2 + $0x5]]
    %v292 = vstv %s291
    %v293 = vmul.f32 %v283, %v292
    %v294 = vmul.f32 %v284, %v292
    %v295 = vmul.f32 %v285, %v292
    %v296 = vmul.f32 %v286, %v292
    %v297 = vmul.f32 %v287, %v292
    %v298 = vmul.f32 %v288, %v292
    %v299 = vmul.f32 %v289, %v292
    %v300 = vmul.f32 %v290, %v292
    %v301 = vadd.f32 %v257, %v293
    %v302 = vadd.f32 %v258, %v294
    %v303 = vadd.f32 %v259, %v295
    %v304 = vadd.f32 %v260, %v296
    %v305 = vadd.f32 %v261, %v297
    %v306 = vadd.f32 %v262, %v298
    %v307 = vadd.f32 %v263, %v299
    %v308 = vadd.f32 %v264, %v300
    %s309 = sld [smem:[#allocation2 + $0x85]]
    %v310 = vstv %s309
    %v311 = vmul.f32 %v283, %v310
    %v312 = vmul.f32 %v284, %v310
    %v313 = vmul.f32 %v285, %v310
    %v314 = vmul.f32 %v286, %v310
    %v315 = vmul.f32 %v287, %v310
    %v316 = vmul.f32 %v288, %v310
    %v317 = vmul.f32 %v289, %v310
    %v318 = vmul.f32 %v290, %v310
    %v319 = vadd.f32 %v275, %v311
    %v320 = vadd.f32 %v276, %v312
    %v321 = vadd.f32 %v277, %v313
    %v322 = vadd.f32 %v278, %v314
    %v323 = vadd.f32 %v279, %v315
    %v324 = vadd.f32 %v280, %v316
    %v325 = vadd.f32 %v281, %v317
    %v326 = vadd.f32 %v282, %v318
    %v327 = vld [vmem:[#allocation8 + $0x6] sm:$0x1]
    %v328 = vld [vmem:[#allocation8 + $0xe] sm:$0x1]
    %v329 = vld [vmem:[#allocation8 + $0x16] sm:$0x1]
    %v330 = vld [vmem:[#allocation8 + $0x1e] sm:$0x1]
    %v331 = vld [vmem:[#allocation8 + $0x26] sm:$0x1]
    %v332 = vld [vmem:[#allocation8 + $0x2e] sm:$0x1]
    %v333 = vld [vmem:[#allocation8 + $0x36] sm:$0x1]
    %v334 = vld [vmem:[#allocation8 + $0x3e] sm:$0x1]
    %s335 = sld [smem:[#allocation2 + $0x6]]
    %v336 = vstv %s335
    %v337 = vmul.f32 %v327, %v336
    %v338 = vmul.f32 %v328, %v336
    %v339 = vmul.f32 %v329, %v336
    %v340 = vmul.f32 %v330, %v336
    %v341 = vmul.f32 %v331, %v336
    %v342 = vmul.f32 %v332, %v336
    %v343 = vmul.f32 %v333, %v336
    %v344 = vmul.f32 %v334, %v336
    %v345 = vadd.f32 %v301, %v337
    %v346 = vadd.f32 %v302, %v338
    %v347 = vadd.f32 %v303, %v339
    %v348 = vadd.f32 %v304, %v340
    %v349 = vadd.f32 %v305, %v341
    %v350 = vadd.f32 %v306, %v342
    %v351 = vadd.f32 %v307, %v343
    %v352 = vadd.f32 %v308, %v344
    %s353 = sld [smem:[#allocation2 + $0x86]]
    %v354 = vstv %s353
    %v355 = vmul.f32 %v327, %v354
    %v356 = vmul.f32 %v328, %v354
    %v357 = vmul.f32 %v329, %v354
    %v358 = vmul.f32 %v330, %v354
    %v359 = vmul.f32 %v331, %v354
    %v360 = vmul.f32 %v332, %v354
    %v361 = vmul.f32 %v333, %v354
    %v362 = vmul.f32 %v334, %v354
    %v363 = vadd.f32 %v319, %v355
    %v364 = vadd.f32 %v320, %v356
    %v365 = vadd.f32 %v321, %v357
    %v366 = vadd.f32 %v322, %v358
    %v367 = vadd.f32 %v323, %v359
    %v368 = vadd.f32 %v324, %v360
    %v369 = vadd.f32 %v325, %v361
    %v370 = vadd.f32 %v326, %v362
    %v371 = vld [vmem:[#allocation8 + $0x7] sm:$0x1]
    %v372 = vld [vmem:[#allocation8 + $0xf] sm:$0x1]
    %v373 = vld [vmem:[#allocation8 + $0x17] sm:$0x1]
    %v374 = vld [vmem:[#allocation8 + $0x1f] sm:$0x1]
    %v375 = vld [vmem:[#allocation8 + $0x27] sm:$0x1]
    %v376 = vld [vmem:[#allocation8 + $0x2f] sm:$0x1]
    %v377 = vld [vmem:[#allocation8 + $0x37] sm:$0x1]
    %v378 = vld [vmem:[#allocation8 + $0x3f] sm:$0x1]
    %s379 = sld [smem:[#allocation2 + $0x7]]
    %v380 = vstv %s379
    %v381 = vmul.f32 %v371, %v380
    %v382 = vmul.f32 %v372, %v380
    %v383 = vmul.f32 %v373, %v380
    %v384 = vmul.f32 %v374, %v380
    %v385 = vmul.f32 %v375, %v380
    %v386 = vmul.f32 %v376, %v380
    %v387 = vmul.f32 %v377, %v380
    %v388 = vmul.f32 %v378, %v380
    %v389 = vadd.f32 %v345, %v381
    %v390 = vadd.f32 %v346, %v382
    %v391 = vadd.f32 %v347, %v383
    %v392 = vadd.f32 %v348, %v384
    %v393 = vadd.f32 %v349, %v385
    %v394 = vadd.f32 %v350, %v386
    %v395 = vadd.f32 %v351, %v387
    %v396 = vadd.f32 %v352, %v388
    %s397 = sld [smem:[#allocation2 + $0x87]]
    %v398 = vstv %s397
    %v399 = vmul.f32 %v371, %v398
    %v400 = vmul.f32 %v372, %v398
    %v401 = vmul.f32 %v373, %v398
    %v402 = vmul.f32 %v374, %v398
    %v403 = vmul.f32 %v375, %v398
    %v404 = vmul.f32 %v376, %v398
    %v405 = vmul.f32 %v377, %v398
    %v406 = vmul.f32 %v378, %v398
    %v407 = vadd.f32 %v363, %v399
    %v408 = vadd.f32 %v364, %v400
    %v409 = vadd.f32 %v365, %v401
    %v410 = vadd.f32 %v366, %v402
    %v411 = vadd.f32 %v367, %v403
    %v412 = vadd.f32 %v368, %v404
    %v413 = vadd.f32 %v369, %v405
    %v414 = vadd.f32 %v370, %v406
    %s415 = sld [smem:[#allocation6]]
    %v416 = vstv %s415
    %v417 = vadd.f32 %v389, %v416
    %v418 = vadd.f32 %v390, %v416
    %v419 = vadd.f32 %v391, %v416
    %v420 = vadd.f32 %v392, %v416
    %v421 = vadd.f32 %v393, %v416
    %v422 = vadd.f32 %v394, %v416
    %v423 = vadd.f32 %v395, %v416
    %v424 = vadd.f32 %v396, %v416
    %v425 = vmax.f32 %v417, 0.0
    %v426 = vmax.f32 %v418, 0.0
    %v427 = vmax.f32 %v419, 0.0
    %v428 = vmax.f32 %v420, 0.0
    %v429 = vmax.f32 %v421, 0.0
    %v430 = vmax.f32 %v422, 0.0
    %v431 = vmax.f32 %v423, 0.0
    %v432 = vmax.f32 %v424, 0.0
    %v433 = vpack.c.bf16 %v425, %v425
    %v434 = vpack.c.bf16 %v426, %v426
    %v435 = vpack.c.bf16 %v427, %v427
    %v436 = vpack.c.bf16 %v428, %v428
    %v437 = vpack.c.bf16 %v429, %v429
    %v438 = vpack.c.bf16 %v430, %v430
    %v439 = vpack.c.bf16 %v431, %v431
    %v440 = vpack.c.bf16 %v432, %v432
    %s441 = sld [smem:[#allocation6 + $0x1]]
    %v442 = vstv %s441
    %v443 = vadd.f32 %v407, %v442
    %v444 = vadd.f32 %v408, %v442
    %v445 = vadd.f32 %v409, %v442
    %v446 = vadd.f32 %v410, %v442
    %v447 = vadd.f32 %v411, %v442
    %v448 = vadd.f32 %v412, %v442
    %v449 = vadd.f32 %v413, %v442
    %v450 = vadd.f32 %v414, %v442
    %v451 = vmax.f32 %v443, 0.0
    %v452 = vmax.f32 %v444, 0.0
    %v453 = vmax.f32 %v445, 0.0
    %v454 = vmax.f32 %v446, 0.0
    %v455 = vmax.f32 %v447, 0.0
    %v456 = vmax.f32 %v448, 0.0
    %v457 = vmax.f32 %v449, 0.0
    %v458 = vmax.f32 %v450, 0.0
    %v459 = vpack.c.bf16 %v451, %v451
    %v460 = vpack.c.bf16 %v452, %v452
    %v461 = vpack.c.bf16 %v453, %v453
    %v462 = vpack.c.bf16 %v454, %v454
    %v463 = vpack.c.bf16 %v455, %v455
    %v464 = vpack.c.bf16 %v456, %v456
    %v465 = vpack.c.bf16 %v457, %v457
    %v466 = vpack.c.bf16 %v458, %v458
    %v467 = vld [vmem:[#allocation9] sm:$0xf]
    %v468 = vld [vmem:[#allocation9 + $0x4] sm:$0xf]
    %v469 = vld [vmem:[#allocation9 + $0x8] sm:$0xf]
    %v470 = vld [vmem:[#allocation9 + $0xc] sm:$0xf]
    %v471 = vld [vmem:[#allocation9 + $0x10] sm:$0xf]
    %v472 = vld [vmem:[#allocation9 + $0x14] sm:$0xf]
    %v473 = vld [vmem:[#allocation9 + $0x18] sm:$0xf]
    %v474 = vld [vmem:[#allocation9 + $0x1c] sm:$0xf]
    %s475 = scalar_lea.vmem [#allocation9], 32
    %v476 = vld [vmem:[%s475] sm:$0xf]
    %v477 = vld [vmem:[%s475 + $0x4] sm:$0xf]
    %v478 = vld [vmem:[%s475 + $0x8] sm:$0xf]
    %v479 = vld [vmem:[%s475 + $0xc] sm:$0xf]
    %v480 = vld [vmem:[%s475 + $0x10] sm:$0xf]
    %v481 = vld [vmem:[%s475 + $0x14] sm:$0xf]
    %v482 = vld [vmem:[%s475 + $0x18] sm:$0xf]
    %v483 = vld [vmem:[%s475 + $0x1c] sm:$0xf]
    %v492 = vunpack.c.l.b16 %v459
    %v493 = vunpack.c.l.b16 %v460
    %v494 = vunpack.c.l.b16 %v461
    %v495 = vunpack.c.l.b16 %v462
    %v496 = vunpack.c.l.b16 %v463
    %v497 = vunpack.c.l.b16 %v464
    %v498 = vunpack.c.l.b16 %v465
    %v499 = vunpack.c.l.b16 %v466
    %v500 = vrot.slane %v493, 7
    %vm501 = vcmask 1041409
    %v502 = vsel %vm501, %v500, %v492
    %v503 = vrot.slane %v494, 6
    %vm504 = vcmask 1042434
    %v505 = vsel %vm504, %v503, %v502
    %v506 = vrot.slane %v495, 5
    %vm507 = vcmask 1043459
    %v508 = vsel %vm507, %v506, %v505
    %v509 = vrot.slane %v496, 4
    %vm510 = vcmask 1044484
    %v511 = vsel %vm510, %v509, %v508
    %v512 = vrot.slane %v497, 3
    %vm513 = vcmask 1045509
    %v514 = vsel %vm513, %v512, %v511
    %v515 = vrot.slane %v498, 2
    %vm516 = vcmask 1046534
    %v517 = vsel %vm516, %v515, %v514
    %v518 = vrot.slane %v499, 1
    %vm519 = vcmask 1047559
    %v520 = vsel %vm519, %v518, %v517
    %v521 = vpack.c.b16 %v520, %v520
    %v530 = vunpack.c.l.b16 %v476
    %v531 = vunpack.c.l.b16 %v477
    %v532 = vunpack.c.l.b16 %v478
    %v533 = vunpack.c.l.b16 %v479
    %v534 = vunpack.c.l.b16 %v480
    %v535 = vunpack.c.l.b16 %v481
    %v536 = vunpack.c.l.b16 %v482
    %v537 = vunpack.c.l.b16 %v483
    %v538 = vpack.c.b16 %v531, %v530
    %v539 = vpack.c.b16 %v533, %v532
    %v540 = vpack.c.b16 %v535, %v534
    %v541 = vpack.c.b16 %v537, %v536
    %vm546 = vcmask 523264
    %v548 = vsel %vm546, %v521, 0
    %550 = vmatpush.bf16.msra.mxu0 0
    %551 = vmatpush.bf16.msra.mxu0 0
    %552 = vmatpush.bf16.msra.mxu0 0
    %553 = vmatpush.bf16.msra.mxu0 0
    %554 = vmatpush.bf16.msra.mxu0 %v541
    %555 = vmatpush.bf16.msra.mxu0 %v540
    %556 = vmatpush.bf16.msra.mxu0 %v539
    %557 = vmatpush.bf16.msra.mxu0 %v538
    %558 = vmatmul.bf16.gmra.mxu0 %v548
    %v559 = vpop.f32.mrf.mxu0
    %v560 = vadd.f32 0.0, %v559
    %v561 = vpop.f32.mrf.mxu0
    %562 = vdwg.mxu0
    %v571 = vunpack.c.l.b16 %v433
    %v572 = vunpack.c.l.b16 %v434
    %v573 = vunpack.c.l.b16 %v435
    %v574 = vunpack.c.l.b16 %v436
    %v575 = vunpack.c.l.b16 %v437
    %v576 = vunpack.c.l.b16 %v438
    %v577 = vunpack.c.l.b16 %v439
    %v578 = vunpack.c.l.b16 %v440
    %v579 = vrot.slane %v572, 7
    %v580 = vsel %vm501, %v579, %v571
    %v581 = vrot.slane %v573, 6
    %v582 = vsel %vm504, %v581, %v580
    %v583 = vrot.slane %v574, 5
    %v584 = vsel %vm507, %v583, %v582
    %v585 = vrot.slane %v575, 4
    %v586 = vsel %vm510, %v585, %v584
    %v587 = vrot.slane %v576, 3
    %v588 = vsel %vm513, %v587, %v586
    %v589 = vrot.slane %v577, 2
    %v590 = vsel %vm516, %v589, %v588
    %v591 = vrot.slane %v578, 1
    %v592 = vsel %vm519, %v591, %v590
    %v593 = vpack.c.b16 %v592, %v592
    %v602 = vunpack.c.l.b16 %v467
    %v603 = vunpack.c.l.b16 %v468
    %v604 = vunpack.c.l.b16 %v469
    %v605 = vunpack.c.l.b16 %v470
    %v606 = vunpack.c.l.b16 %v471
    %v607 = vunpack.c.l.b16 %v472
    %v608 = vunpack.c.l.b16 %v473
    %v609 = vunpack.c.l.b16 %v474
    %v610 = vpack.c.b16 %v603, %v602
    %v611 = vpack.c.b16 %v605, %v604
    %v612 = vpack.c.b16 %v607, %v606
    %v613 = vpack.c.b16 %v609, %v608
    %v619 = vsel %vm546, %v593, 0
    %621 = vmatpush.bf16.msra.mxu0 0
    %622 = vmatpush.bf16.msra.mxu0 0
    %623 = vmatpush.bf16.msra.mxu0 0
    %624 = vmatpush.bf16.msra.mxu0 0
    %625 = vmatpush.bf16.msra.mxu0 %v613
    %626 = vmatpush.bf16.msra.mxu0 %v612
    %627 = vmatpush.bf16.msra.mxu0 %v611
    %628 = vmatpush.bf16.msra.mxu0 %v610
    %629 = vmatmul.bf16.gmra.mxu0 %v619
    %v630 = vpop.f32.mrf.mxu0
    %v631 = vadd.f32 %v560, %v630
    %v632 = vpop.f32.mrf.mxu0
    %633 = vdwg.mxu0
    %v634 = vld [vmem:[%s4] sm:$0x1]
    %v636 = vperm.slane %v634, 0
    %v638 = vadd.f32 %v631, %v636
    %v639 = vsel %vm546, %v638, -inf
    %640 = vmax.xlane.f32.xlu0 %v639
    %v641 = vpop.xlane.xlu0 %640
    %v642 = vsub.f32 %v638, %v641
    %v643 = vmul.f32 %v642, 1.442695
    %v644 = vpow.pop %v643
    %v645 = vsel %vm546, %v644, 0.0
    %646 = vadd.xlane.f32.xlu0 %v645
    %v647 = vpop.xlane.xlu0 %646
    %v648 = vlog2.pop %v647
    %v649 = vmul.f32 %v648, 0.6931472
    %v650 = vsub.f32 %v642, %v649
    %651 = vst.msk [vmem:[#allocation11] sm:$0xff] %vm546, %v650
    // Predicated region
    $region38: #{tpu_custom_call.1} parent=1 // pred_check
      _
    $region39: #{tpu_custom_call.1} parent=1 // pred_check_branch
      %653 = sbr.rel (0) target = $region41
    $region40: #{tpu_custom_call.1} parent=1 // pred_region
      %655 = vsyncadd [#allocation4], 0
      %s657 = sshll.u32 [#allocation11], 4
      %s658 = int_to_ptr.vmem [resolvable:$true] %s657
      %s659 = sshll.u32 %s5, 4
      %s660 = int_to_ptr.hbm [resolvable:$true] %s659
      %662 = dma.vmem_to_hbm [thread:$0]  %s658, 128, %s660, [#allocation4]
    $region41: #{tpu_custom_call.1} parent=1 // pred_fallthru
      _
    // Predicated region
    $region42: #{tpu_custom_call.1} parent=1 // pred_check
      _
    $region43: #{tpu_custom_call.1} parent=1 // pred_check_branch
      %664 = sbr.rel (0) target = $region45
    $region44: #{tpu_custom_call.1} parent=1 // pred_region
      %666 = dma.done [#allocation4], 128
    $region45: #{tpu_custom_call.1} parent=1 // pred_fallthru
      _
    %667 = vsyncpa [#allocation3], 1
    %668 = vsyncpa [#allocation10], 1
    %669 = vsyncpa [#allocation4], 1
    %670 = vsyncpa [#allocation5], 1
    %671 = vsyncpa [#allocation7], 1

</llo_original>
